<compile_context>
chip_gen: v6e
topology: v6e:2x2x1
jax: 0.10.0
libtpu: 0.0.40
codegen_flags: <defaults>
</compile_context>

<pallas_src>
import jax
import jax.numpy as jnp
from jax.experimental import pallas as pl
from jax.experimental.pallas import tpu as pltpu

N = 32   # hard-coded batch size in the module
C = 12   # joint channels
S = 3    # stat rows (avg / low / high)
F = 73   # 3 point features + 70 sequence features


def type4_kernel(a_ref, bias_ref, j_ref, out_ref):
    # a_ref:    (3, N, C) VMEM  — a[j, n, c] = x[n, c, 0, j]
    # bias_ref: (3, C)    VMEM  — bias[k, c] = (threhold.sum(1) @ J)[c, k]
    # j_ref:    (9,)      SMEM  — j_ref[3*j + k] = 3 * J[j, k]
    a0 = a_ref[0]               # (N, C)
    a1 = a_ref[1]
    a2 = a_ref[2]
    b0 = bias_ref[0:1, :]       # (1, C) — broadcasts over N sublanes
    b1 = bias_ref[1:2, :]
    b2 = bias_ref[2:3, :]

    # r_k = sum_j (3*J[j,k]) * a_j - bias_k : 9 scalar-broadcast FMAs on the VPU.
    r0 = j_ref[0] * a0 + j_ref[3] * a1 + j_ref[6] * a2 - b0
    r1 = j_ref[1] * a0 + j_ref[4] * a1 + j_ref[7] * a2 - b1
    r2 = j_ref[2] * a0 + j_ref[5] * a1 + j_ref[8] * a2 - b2

    # Softmax over the size-3 k axis, unrolled into elementwise VPU/EUP ops.
    m = jnp.maximum(jnp.maximum(r0, r1), r2)
    e0 = jnp.exp(r0 - m)
    e1 = jnp.exp(r1 - m)
    e2 = jnp.exp(r2 - m)
    inv = 1.0 / (e0 + e1 + e2)          # exact divide: keep 1e-5 vs reference

    # Sum over the C channel lanes, per sample and per k.
    s0 = jnp.sum(e0 * inv, axis=-1, keepdims=True)   # (N, 1)
    s1 = jnp.sum(e1 * inv, axis=-1, keepdims=True)
    s2 = jnp.sum(e2 * inv, axis=-1, keepdims=True)

    # Assemble (N, 3) with a pure-VPU select (avoids lane concat / partial stores).
    lane = jax.lax.broadcasted_iota(jnp.int32, (a0.shape[0], 3), 1)
    s = jnp.where(lane == 0, s0, jnp.where(lane == 1, s1, s2))   # (N, 3)

    # batch_results[n] broadcasts the (3,) vector to 12 rows, then sums dim=1.
    out_ref[...] = (12.0 / (1.0 + jnp.exp(-s))).astype(out_ref.dtype)


def type4_forward(x, threhold, jrelation):
    # Slice to the only live part of x, and lay it out as (3, N, C) so the
    # j-contraction unrolls over the leading axis.
    x_point = x[:, :, 0, :3]                                     # (N, C, 3)
    a = jnp.transpose(x_point, (2, 0, 1)).astype(jnp.float32)    # (3, N, C)
    # Parameter-only constants, folded outside the kernel.
    bias_t = (jnp.sum(threhold, axis=1) @ jrelation).T           # (3, C)
    bias_t = bias_t.astype(jnp.float32)
    j9 = (3.0 * jrelation).astype(jnp.float32).reshape(-1)       # (9,)

    return pl.pallas_call(
        type4_kernel,
        out_shape=jax.ShapeDtypeStruct((N, 3), jnp.float32),
        in_specs=[
            pl.BlockSpec(memory_space=pltpu.MemorySpace.VMEM),   # a       (3,N,C)
            pl.BlockSpec(memory_space=pltpu.MemorySpace.VMEM),   # bias_t  (3,C)
            pl.BlockSpec(memory_space=pltpu.MemorySpace.SMEM),   # j9      (9,)
        ],
        out_specs=pl.BlockSpec(memory_space=pltpu.MemorySpace.VMEM),
        cost_estimate=pl.CostEstimate(
            flops=12_000, transcendentals=1_248, bytes_accessed=5_184),
    )(a, bias_t, j9)


def type4_reference(x, threhold, jrelation):
    """Pure-JAX reference mirroring the PyTorch forward, for verification."""
    x_point = x[:, :, 0, :3]                                   # (N, C, 3)
    tsum = jnp.sum(threhold, axis=1)                           # (C, 3)
    a = 3.0 * x_point - tsum[None, :, :]                       # (N, C, 3)
    r = jnp.einsum("ncj,jk->nck", a, jrelation)                # (N, C, 3)
    sm = jax.nn.softmax(r, axis=-1)
    sig = jax.nn.sigmoid(jnp.sum(sm, axis=1))                  # (N, 3)
    return 12.0 * sig


if __name__ == "__main__":
    key = jax.random.PRNGKey(0)
    kx, kt, kj = jax.random.split(key, 3)

    # Shapes per Type4.__init__ / forward (batch=32, C=12, stats=3, features=73).
    x = jax.random.normal(kx, (N, C, S, F), dtype=jnp.float32)
    attention = jnp.ones((C, F - 3), dtype=jnp.float32)        # dead w.r.t. output
    threhold = 0.1 * jax.random.normal(kt, (C, 3, 3), dtype=jnp.float32)
    jrelation = jax.random.normal(kj, (3, 3), dtype=jnp.float32)

    fwd = jax.jit(type4_forward)   # lets XLA fuse the tiny slice/fold ops around the call
    out = jax.block_until_ready(fwd(x, threhold, jrelation))

    ref = type4_reference(x, threhold, jrelation)
    assert out.shape == (N, 3)
    assert jnp.allclose(out, ref, atol=1e-5, rtol=1e-5), "mismatch vs reference"

    print("KERNEL_OK")
</pallas_src>

<mosaic_0001>
module attributes {stable_mosaic.version = 11 : i64} {
  func.func @type4_kernel(%arg0: memref<3x32x12xf32, #tpu.memory_space<vmem>>, %arg1: memref<3x12xf32, #tpu.memory_space<vmem>>, %arg2: memref<9xf32, #tpu.memory_space<smem>>, %arg3: memref<32x3xf32, #tpu.memory_space<vmem>>) attributes {dimension_semantics = [], scalar_prefetch = 0 : i64, scratch_operands = 0 : i64, tpu.core_type = #tpu.core_type<tc>} {
    %c0 = arith.constant 0 : index
    %c0_0 = arith.constant 0 : index
    %c0_1 = arith.constant 0 : index
    %0 = vector.load %arg0[%c0, %c0_0, %c0_1] : memref<3x32x12xf32, #tpu.memory_space<vmem>>, vector<1x32x12xf32>
    %1 = vector.shape_cast %0 : vector<1x32x12xf32> to vector<32x12xf32>
    %c1 = arith.constant 1 : index
    %c0_2 = arith.constant 0 : index
    %c0_3 = arith.constant 0 : index
    %2 = vector.load %arg0[%c1, %c0_2, %c0_3] : memref<3x32x12xf32, #tpu.memory_space<vmem>>, vector<1x32x12xf32>
    %3 = vector.shape_cast %2 : vector<1x32x12xf32> to vector<32x12xf32>
    %c2 = arith.constant 2 : index
    %c0_4 = arith.constant 0 : index
    %c0_5 = arith.constant 0 : index
    %4 = vector.load %arg0[%c2, %c0_4, %c0_5] : memref<3x32x12xf32, #tpu.memory_space<vmem>>, vector<1x32x12xf32>
    %5 = vector.shape_cast %4 : vector<1x32x12xf32> to vector<32x12xf32>
    %c0_6 = arith.constant 0 : index
    %c0_7 = arith.constant 0 : index
    %6 = vector.load %arg1[%c0_6, %c0_7] : memref<3x12xf32, #tpu.memory_space<vmem>>, vector<1x12xf32>
    %c1_8 = arith.constant 1 : index
    %c0_9 = arith.constant 0 : index
    %7 = vector.load %arg1[%c1_8, %c0_9] : memref<3x12xf32, #tpu.memory_space<vmem>>, vector<1x12xf32>
    %c2_10 = arith.constant 2 : index
    %c0_11 = arith.constant 0 : index
    %8 = vector.load %arg1[%c2_10, %c0_11] : memref<3x12xf32, #tpu.memory_space<vmem>>, vector<1x12xf32>
    %c0_12 = arith.constant 0 : index
    %9 = memref.load %arg2[%c0_12] : memref<9xf32, #tpu.memory_space<smem>>
    %10 = vector.broadcast %9 : f32 to vector<32x12xf32>
    %11 = arith.mulf %10, %1 : vector<32x12xf32>
    %c3 = arith.constant 3 : index
    %12 = memref.load %arg2[%c3] : memref<9xf32, #tpu.memory_space<smem>>
    %13 = vector.broadcast %12 : f32 to vector<32x12xf32>
    %14 = arith.mulf %13, %3 : vector<32x12xf32>
    %15 = arith.addf %11, %14 : vector<32x12xf32>
    %c6 = arith.constant 6 : index
    %16 = memref.load %arg2[%c6] : memref<9xf32, #tpu.memory_space<smem>>
    %17 = vector.broadcast %16 : f32 to vector<32x12xf32>
    %18 = arith.mulf %17, %5 : vector<32x12xf32>
    %19 = arith.addf %15, %18 : vector<32x12xf32>
    %20 = vector.broadcast %6 : vector<1x12xf32> to vector<32x12xf32>
    %21 = arith.subf %19, %20 : vector<32x12xf32>
    %c1_13 = arith.constant 1 : index
    %22 = memref.load %arg2[%c1_13] : memref<9xf32, #tpu.memory_space<smem>>
    %23 = vector.broadcast %22 : f32 to vector<32x12xf32>
    %24 = arith.mulf %23, %1 : vector<32x12xf32>
    %c4 = arith.constant 4 : index
    %25 = memref.load %arg2[%c4] : memref<9xf32, #tpu.memory_space<smem>>
    %26 = vector.broadcast %25 : f32 to vector<32x12xf32>
    %27 = arith.mulf %26, %3 : vector<32x12xf32>
    %28 = arith.addf %24, %27 : vector<32x12xf32>
    %c7 = arith.constant 7 : index
    %29 = memref.load %arg2[%c7] : memref<9xf32, #tpu.memory_space<smem>>
    %30 = vector.broadcast %29 : f32 to vector<32x12xf32>
    %31 = arith.mulf %30, %5 : vector<32x12xf32>
    %32 = arith.addf %28, %31 : vector<32x12xf32>
    %33 = vector.broadcast %7 : vector<1x12xf32> to vector<32x12xf32>
    %34 = arith.subf %32, %33 : vector<32x12xf32>
    %c2_14 = arith.constant 2 : index
    %35 = memref.load %arg2[%c2_14] : memref<9xf32, #tpu.memory_space<smem>>
    %36 = vector.broadcast %35 : f32 to vector<32x12xf32>
    %37 = arith.mulf %36, %1 : vector<32x12xf32>
    %c5 = arith.constant 5 : index
    %38 = memref.load %arg2[%c5] : memref<9xf32, #tpu.memory_space<smem>>
    %39 = vector.broadcast %38 : f32 to vector<32x12xf32>
    %40 = arith.mulf %39, %3 : vector<32x12xf32>
    %41 = arith.addf %37, %40 : vector<32x12xf32>
    %c8 = arith.constant 8 : index
    %42 = memref.load %arg2[%c8] : memref<9xf32, #tpu.memory_space<smem>>
    %43 = vector.broadcast %42 : f32 to vector<32x12xf32>
    %44 = arith.mulf %43, %5 : vector<32x12xf32>
    %45 = arith.addf %41, %44 : vector<32x12xf32>
    %46 = vector.broadcast %8 : vector<1x12xf32> to vector<32x12xf32>
    %47 = arith.subf %45, %46 : vector<32x12xf32>
    %48 = arith.maximumf %21, %34 : vector<32x12xf32>
    %49 = arith.maximumf %48, %47 : vector<32x12xf32>
    %50 = arith.subf %21, %49 : vector<32x12xf32>
    %51 = math.exp %50 : vector<32x12xf32>
    %52 = arith.subf %34, %49 : vector<32x12xf32>
    %53 = math.exp %52 : vector<32x12xf32>
    %54 = arith.subf %47, %49 : vector<32x12xf32>
    %55 = math.exp %54 : vector<32x12xf32>
    %56 = arith.addf %51, %53 : vector<32x12xf32>
    %57 = arith.addf %56, %55 : vector<32x12xf32>
    %cst = arith.constant 1.000000e+00 : f32
    %58 = vector.broadcast %cst : f32 to vector<32x12xf32>
    %59 = arith.divf %58, %57 : vector<32x12xf32>
    %60 = arith.mulf %51, %59 : vector<32x12xf32>
    %cst_15 = arith.constant dense<0.000000e+00> : vector<32xf32>
    %61 = vector.multi_reduction <add>, %60, %cst_15 [1] : vector<32x12xf32> to vector<32xf32>
    %62 = vector.shape_cast %61 : vector<32xf32> to vector<32x1xf32>
    %63 = arith.mulf %53, %59 : vector<32x12xf32>
    %cst_16 = arith.constant dense<0.000000e+00> : vector<32xf32>
    %64 = vector.multi_reduction <add>, %63, %cst_16 [1] : vector<32x12xf32> to vector<32xf32>
    %65 = vector.shape_cast %64 : vector<32xf32> to vector<32x1xf32>
    %66 = arith.mulf %55, %59 : vector<32x12xf32>
    %cst_17 = arith.constant dense<0.000000e+00> : vector<32xf32>
    %67 = vector.multi_reduction <add>, %66, %cst_17 [1] : vector<32x12xf32> to vector<32xf32>
    %68 = vector.shape_cast %67 : vector<32xf32> to vector<32x1xf32>
    %69 = tpu.iota {dimensions = array<i32: 1>} : vector<32x3xi32>
    %c0_i32 = arith.constant 0 : i32
    %70 = vector.broadcast %c0_i32 : i32 to vector<32x3xi32>
    %71 = arith.cmpi eq, %69, %70 : vector<32x3xi32>
    %c1_i32 = arith.constant 1 : i32
    %72 = vector.broadcast %c1_i32 : i32 to vector<32x3xi32>
    %73 = arith.cmpi eq, %69, %72 : vector<32x3xi32>
    %74 = vector.shape_cast %65 : vector<32x1xf32> to vector<32x1xf32>
    %75 = vector.broadcast %74 : vector<32x1xf32> to vector<32x3xf32>
    %76 = vector.shape_cast %68 : vector<32x1xf32> to vector<32x1xf32>
    %77 = vector.broadcast %76 : vector<32x1xf32> to vector<32x3xf32>
    %78 = arith.select %73, %75, %77 : vector<32x3xi1>, vector<32x3xf32>
    %79 = vector.shape_cast %62 : vector<32x1xf32> to vector<32x1xf32>
    %80 = vector.broadcast %79 : vector<32x1xf32> to vector<32x3xf32>
    %81 = arith.select %71, %80, %78 : vector<32x3xi1>, vector<32x3xf32>
    %cst_18 = arith.constant 0.000000e+00 : f32
    %82 = vector.broadcast %cst_18 : f32 to vector<32x3xf32>
    %83 = arith.subf %82, %81 : vector<32x3xf32>
    %84 = math.exp %83 : vector<32x3xf32>
    %cst_19 = arith.constant 1.000000e+00 : f32
    %85 = vector.broadcast %cst_19 : f32 to vector<32x3xf32>
    %86 = arith.addf %85, %84 : vector<32x3xf32>
    %cst_20 = arith.constant 1.200000e+01 : f32
    %87 = vector.broadcast %cst_20 : f32 to vector<32x3xf32>
    %88 = arith.divf %87, %86 : vector<32x3xf32>
    %c0_21 = arith.constant 0 : index
    %c0_22 = arith.constant 0 : index
    %89 = vector.load %arg3[%c0_21, %c0_22] : memref<32x3xf32, #tpu.memory_space<vmem>>, vector<32x3xf32>
    tpu.vector_store %arg3[%c0_21, %c0_22], %88 {strides = array<i32>} : memref<32x3xf32, #tpu.memory_space<vmem>>, vector<32x3xf32>,
    return
  }
}

</mosaic_0001>

<llo_original>
// kernel: type4_forward.1
$region0: #{type4_forward.1}
  #allocation0 [shape = 'u32[]', space=smem, size = 0x4, offset = 0x4, fixed_abs, tag = 'smem constant byte address 0x4 - core index']
  #allocation1 [shape = 'u32[144,128]{1,0:T(1,128)}', space=vmem, size = 0x12000, scoped, tag = 'internal scratch']
  %s0 = inlined_call_operand.vmem [shape: f32[3,32,12], index: 0, kind: input, shape index: {}]
  %s1 = inlined_call_operand.vmem [shape: f32[3,12], index: 1, kind: input, shape index: {}]
  %s2 = inlined_call_operand.vmem [shape: f32[9], index: 2, kind: input, shape index: {}]
  %s3 = inlined_call_operand.vmem [shape: f32[32,3], index: 3, kind: output, shape index: {}]
  %s4 = sld [smem:[#allocation0]]
  $region26: #{type4_forward.1} parent=0
    _
  %s6 = ssub.s32 1, %s4
  %s7 = scalar_select 0, %s6, %s4
  $region1: #{type4_forward.1} parent=0
    #allocation2 [shape = 'u8[512]{0}', space=smem, size = 0x200, scoped, tag = 'input window, operand 2, single buffered']
    #allocation3 [shape = 's32[1]{0}', space=sflag, size = 0x4, scoped, tag = 'scoped memory for type4_forward.1']
    %8 = vsyncpa [#allocation3], 0
    // Predicated region
    $region2: #{type4_forward.1} parent=1 // pred_check
      _
    $region3: #{type4_forward.1} parent=1 // pred_check_branch
      %10 = sbr.rel (0) target = $region5
    $region4: #{type4_forward.1} parent=1 // pred_region
      _
    $region5: #{type4_forward.1} parent=1 // pred_fallthru
      _
    // Predicated region
    $region6: #{type4_forward.1} parent=1 // pred_check
      _
    $region7: #{type4_forward.1} parent=1 // pred_check_branch
      %12 = sbr.rel (0) target = $region9
    $region8: #{type4_forward.1} parent=1 // pred_region
      _
    $region9: #{type4_forward.1} parent=1 // pred_fallthru
      _
    // Predicated region
    $region10: #{type4_forward.1} parent=1 // pred_check
      _
    $region11: #{type4_forward.1} parent=1 // pred_check_branch
      %14 = sbr.rel (0) target = $region13
    $region12: #{type4_forward.1} parent=1 // pred_region
      %s16 = ssub.s32 16, 16
      %17 = vsyncadd [#allocation3], %s16
      %s19 = sshll.u32 %s2, 4
      %s20 = int_to_ptr.vmem [resolvable:$true] %s19
      %22 = dma.vmem_to_smem %s20, 16, [#allocation2], [#allocation3]
    $region13: #{type4_forward.1} parent=1 // pred_fallthru
      _
    // Predicated region
    $region14: #{type4_forward.1} parent=1 // pred_check
      _
    $region15: #{type4_forward.1} parent=1 // pred_check_branch
      %24 = sbr.rel (0) target = $region17
    $region16: #{type4_forward.1} parent=1 // pred_region
      %25 = dma.done [#allocation3], 16
    $region17: #{type4_forward.1} parent=1 // pred_fallthru
      _
    %26 = sfence
    %v27 = vld [vmem:[%s0] sm:$0xff]
    %v28 = vld [vmem:[%s0 + $0x8] sm:$0xff]
    %v29 = vld [vmem:[%s0 + $0x10] sm:$0xff]
    %v30 = vld [vmem:[%s0 + $0x18] sm:$0xff]
    %s31 = scalar_lea.vmem %s0, 32
    %v32 = vld [vmem:[%s31] sm:$0xff]
    %v33 = vld [vmem:[%s31 + $0x8] sm:$0xff]
    %v34 = vld [vmem:[%s31 + $0x10] sm:$0xff]
    %v35 = vld [vmem:[%s31 + $0x18] sm:$0xff]
    %s36 = scalar_lea.vmem %s0, 64
    %v37 = vld [vmem:[%s36] sm:$0xff]
    %v38 = vld [vmem:[%s36 + $0x8] sm:$0xff]
    %v39 = vld [vmem:[%s36 + $0x10] sm:$0xff]
    %v40 = vld [vmem:[%s36 + $0x18] sm:$0xff]
    %v41 = vld [vmem:[%s1] sm:$0x1]
    %v42 = vld [vmem:[%s1 + $0x1] sm:$0x1]
    %v43 = vld [vmem:[%s1 + $0x2] sm:$0x1]
    %s44 = sld [smem:[#allocation2]]
    %v45 = vstv %s44
    %v46 = vmul.f32 %v45, %v27
    %v47 = vmul.f32 %v45, %v28
    %v48 = vmul.f32 %v45, %v29
    %v49 = vmul.f32 %v45, %v30
    %s50 = sld [smem:[#allocation2 + $0x3]]
    %v51 = vstv %s50
    %v52 = vmul.f32 %v51, %v32
    %v53 = vmul.f32 %v51, %v33
    %v54 = vmul.f32 %v51, %v34
    %v55 = vmul.f32 %v51, %v35
    %v56 = vadd.f32 %v46, %v52
    %v57 = vadd.f32 %v47, %v53
    %v58 = vadd.f32 %v48, %v54
    %v59 = vadd.f32 %v49, %v55
    %s60 = sld [smem:[#allocation2 + $0x6]]
    %v61 = vstv %s60
    %v62 = vmul.f32 %v61, %v37
    %v63 = vmul.f32 %v61, %v38
    %v64 = vmul.f32 %v61, %v39
    %v65 = vmul.f32 %v61, %v40
    %v66 = vadd.f32 %v56, %v62
    %v67 = vadd.f32 %v57, %v63
    %v68 = vadd.f32 %v58, %v64
    %v69 = vadd.f32 %v59, %v65
    %v70 = vlaneseq
    %v71 = vshrl.u32 %v70, 7
    %v72 = vsub.s32 0, %v71
    %v73 = vrot.slane %v41, %v72
    %v74 = vsub.f32 %v66, %v73
    %v75 = vsub.f32 %v67, %v73
    %v76 = vsub.f32 %v68, %v73
    %v77 = vsub.f32 %v69, %v73
    %s78 = sld [smem:[#allocation2 + $0x1]]
    %v79 = vstv %s78
    %v80 = vmul.f32 %v79, %v27
    %v81 = vmul.f32 %v79, %v28
    %v82 = vmul.f32 %v79, %v29
    %v83 = vmul.f32 %v79, %v30
    %s84 = sld [smem:[#allocation2 + $0x4]]
    %v85 = vstv %s84
    %v86 = vmul.f32 %v85, %v32
    %v87 = vmul.f32 %v85, %v33
    %v88 = vmul.f32 %v85, %v34
    %v89 = vmul.f32 %v85, %v35
    %v90 = vadd.f32 %v80, %v86
    %v91 = vadd.f32 %v81, %v87
    %v92 = vadd.f32 %v82, %v88
    %v93 = vadd.f32 %v83, %v89
    %s94 = sld [smem:[#allocation2 + $0x7]]
    %v95 = vstv %s94
    %v96 = vmul.f32 %v95, %v37
    %v97 = vmul.f32 %v95, %v38
    %v98 = vmul.f32 %v95, %v39
    %v99 = vmul.f32 %v95, %v40
    %v100 = vadd.f32 %v90, %v96
    %v101 = vadd.f32 %v91, %v97
    %v102 = vadd.f32 %v92, %v98
    %v103 = vadd.f32 %v93, %v99
    %v104 = vlaneseq
    %v105 = vshrl.u32 %v104, 7
    %v106 = vsub.s32 0, %v105
    %v107 = vrot.slane %v42, %v106
    %v108 = vsub.f32 %v100, %v107
    %v109 = vsub.f32 %v101, %v107
    %v110 = vsub.f32 %v102, %v107
    %v111 = vsub.f32 %v103, %v107
    %s112 = sld [smem:[#allocation2 + $0x2]]
    %v113 = vstv %s112
    %v114 = vmul.f32 %v113, %v27
    %v115 = vmul.f32 %v113, %v28
    %v116 = vmul.f32 %v113, %v29
    %v117 = vmul.f32 %v113, %v30
    %s118 = sld [smem:[#allocation2 + $0x5]]
    %v119 = vstv %s118
    %v120 = vmul.f32 %v119, %v32
    %v121 = vmul.f32 %v119, %v33
    %v122 = vmul.f32 %v119, %v34
    %v123 = vmul.f32 %v119, %v35
    %v124 = vadd.f32 %v114, %v120
    %v125 = vadd.f32 %v115, %v121
    %v126 = vadd.f32 %v116, %v122
    %v127 = vadd.f32 %v117, %v123
    %s128 = sld [smem:[#allocation2 + $0x8]]
    %v129 = vstv %s128
    %v130 = vmul.f32 %v129, %v37
    %v131 = vmul.f32 %v129, %v38
    %v132 = vmul.f32 %v129, %v39
    %v133 = vmul.f32 %v129, %v40
    %v134 = vadd.f32 %v124, %v130
    %v135 = vadd.f32 %v125, %v131
    %v136 = vadd.f32 %v126, %v132
    %v137 = vadd.f32 %v127, %v133
    %v138 = vlaneseq
    %v139 = vshrl.u32 %v138, 7
    %v140 = vsub.s32 0, %v139
    %v141 = vrot.slane %v43, %v140
    %v142 = vsub.f32 %v134, %v141
    %v143 = vsub.f32 %v135, %v141
    %v144 = vsub.f32 %v136, %v141
    %v145 = vsub.f32 %v137, %v141
    %v146 = vmax.f32 %v74, %v108
    %v147 = vmax.f32 %v75, %v109
    %v148 = vmax.f32 %v76, %v110
    %v149 = vmax.f32 %v77, %v111
    %v150 = vmax.f32 %v146, %v142
    %v151 = vmax.f32 %v147, %v143
    %v152 = vmax.f32 %v148, %v144
    %v153 = vmax.f32 %v149, %v145
    %v154 = vsub.f32 %v74, %v150
    %v155 = vsub.f32 %v75, %v151
    %v156 = vsub.f32 %v76, %v152
    %v157 = vsub.f32 %v77, %v153
    %v158 = vmul.f32 %v154, 1.442695
    %v159 = vpow.pop %v158
    %v160 = vmul.f32 %v155, 1.442695
    %v161 = vpow.pop %v160
    %v162 = vmul.f32 %v156, 1.442695
    %v163 = vpow.pop %v162
    %v164 = vmul.f32 %v157, 1.442695
    %v165 = vpow.pop %v164
    %v166 = vsub.f32 %v108, %v150
    %v167 = vsub.f32 %v109, %v151
    %v168 = vsub.f32 %v110, %v152
    %v169 = vsub.f32 %v111, %v153
    %v170 = vmul.f32 %v166, 1.442695
    %v171 = vpow.pop %v170
    %v172 = vmul.f32 %v167, 1.442695
    %v173 = vpow.pop %v172
    %v174 = vmul.f32 %v168, 1.442695
    %v175 = vpow.pop %v174
    %v176 = vmul.f32 %v169, 1.442695
    %v177 = vpow.pop %v176
    %v178 = vsub.f32 %v142, %v150
    %v179 = vsub.f32 %v143, %v151
    %v180 = vsub.f32 %v144, %v152
    %v181 = vsub.f32 %v145, %v153
    %v182 = vmul.f32 %v178, 1.442695
    %v183 = vpow.pop %v182
    %v184 = vmul.f32 %v179, 1.442695
    %v185 = vpow.pop %v184
    %v186 = vmul.f32 %v180, 1.442695
    %v187 = vpow.pop %v186
    %v188 = vmul.f32 %v181, 1.442695
    %v189 = vpow.pop %v188
    %v190 = vadd.f32 %v159, %v171
    %v191 = vadd.f32 %v161, %v173
    %v192 = vadd.f32 %v163, %v175
    %v193 = vadd.f32 %v165, %v177
    %v194 = vadd.f32 %v190, %v183
    %v195 = vadd.f32 %v191, %v185
    %v196 = vadd.f32 %v192, %v187
    %v197 = vadd.f32 %v193, %v189
    %v198 = vrcp.pop %v194
    %v199 = vmul.f32 1.0, %v198
    %v200 = vrcp.pop %v195
    %v201 = vmul.f32 1.0, %v200
    %v202 = vrcp.pop %v196
    %v203 = vmul.f32 1.0, %v202
    %v204 = vrcp.pop %v197
    %v205 = vmul.f32 1.0, %v204
    %v206 = vmul.f32 %v159, %v199
    %v207 = vmul.f32 %v161, %v201
    %v208 = vmul.f32 %v163, %v203
    %v209 = vmul.f32 %v165, %v205
    %vm210 = vcmask 97280
    %v211 = vsel %vm210, %v206, 0.0
    %212 = vadd.xlane.f32.xlu0 %v211
    %v213 = vpop.xlane.xlu0 %212
    %v214 = vsel %vm210, %v207, 0.0
    %215 = vadd.xlane.f32.xlu0 %v214
    %v216 = vpop.xlane.xlu0 %215
    %v217 = vsel %vm210, %v208, 0.0
    %218 = vadd.xlane.f32.xlu0 %v217
    %v219 = vpop.xlane.xlu0 %218
    %v220 = vsel %vm210, %v209, 0.0
    %221 = vadd.xlane.f32.xlu0 %v220
    %v222 = vpop.xlane.xlu0 %221
    %v223 = vmul.f32 %v171, %v199
    %v224 = vmul.f32 %v173, %v201
    %v225 = vmul.f32 %v175, %v203
    %v226 = vmul.f32 %v177, %v205
    %v227 = vsel %vm210, %v223, 0.0
    %228 = vadd.xlane.f32.xlu0 %v227
    %v229 = vpop.xlane.xlu0 %228
    %v230 = vsel %vm210, %v224, 0.0
    %231 = vadd.xlane.f32.xlu0 %v230
    %v232 = vpop.xlane.xlu0 %231
    %v233 = vsel %vm210, %v225, 0.0
    %234 = vadd.xlane.f32.xlu0 %v233
    %v235 = vpop.xlane.xlu0 %234
    %v236 = vsel %vm210, %v226, 0.0
    %237 = vadd.xlane.f32.xlu0 %v236
    %v238 = vpop.xlane.xlu0 %237
    %v239 = vmul.f32 %v183, %v199
    %v240 = vmul.f32 %v185, %v201
    %v241 = vmul.f32 %v187, %v203
    %v242 = vmul.f32 %v189, %v205
    %v243 = vsel %vm210, %v239, 0.0
    %244 = vadd.xlane.f32.xlu0 %v243
    %v245 = vpop.xlane.xlu0 %244
    %v246 = vsel %vm210, %v240, 0.0
    %247 = vadd.xlane.f32.xlu0 %v246
    %v248 = vpop.xlane.xlu0 %247
    %v249 = vsel %vm210, %v241, 0.0
    %250 = vadd.xlane.f32.xlu0 %v249
    %v251 = vpop.xlane.xlu0 %250
    %v252 = vsel %vm210, %v242, 0.0
    %253 = vadd.xlane.f32.xlu0 %v252
    %v254 = vpop.xlane.xlu0 %253
    %v255 = vlaneseq
    %v256 = vand.u32 %v255, 127
    %vm257 = vcmp.eq.s32.totalorder %v256, 0
    %vm258 = vcmp.eq.s32.totalorder %v256, 1
    %v259 = vsel %vm258, %v229, %v245
    %v260 = vsel %vm258, %v232, %v248
    %v261 = vsel %vm258, %v235, %v251
    %v262 = vsel %vm258, %v238, %v254
    %v263 = vsel %vm257, %v213, %v259
    %v264 = vsel %vm257, %v216, %v260
    %v265 = vsel %vm257, %v219, %v261
    %v266 = vsel %vm257, %v222, %v262
    %v267 = vsub.f32 0.0, %v263
    %v268 = vsub.f32 0.0, %v264
    %v269 = vsub.f32 0.0, %v265
    %v270 = vsub.f32 0.0, %v266
    %v271 = vmul.f32 %v267, 1.442695
    %v272 = vpow.pop %v271
    %v273 = vmul.f32 %v268, 1.442695
    %v274 = vpow.pop %v273
    %v275 = vmul.f32 %v269, 1.442695
    %v276 = vpow.pop %v275
    %v277 = vmul.f32 %v270, 1.442695
    %v278 = vpow.pop %v277
    %v279 = vadd.f32 %v272, 1.0
    %v280 = vadd.f32 %v274, 1.0
    %v281 = vadd.f32 %v276, 1.0
    %v282 = vadd.f32 %v278, 1.0
    %v283 = vrcp.pop %v279
    %v284 = vmul.f32 12.0, %v283
    %v285 = vrcp.pop %v280
    %v286 = vmul.f32 12.0, %v285
    %v287 = vrcp.pop %v281
    %v288 = vmul.f32 12.0, %v287
    %v289 = vrcp.pop %v282
    %v290 = vmul.f32 12.0, %v289
    %vm291 = vcmask 23552
    %292 = vst.msk [vmem:[%s3] sm:$0xff] %vm291, %v284
    %293 = vst.msk [vmem:[%s3 + $0x8] sm:$0xff] %vm291, %v286
    %294 = vst.msk [vmem:[%s3 + $0x10] sm:$0xff] %vm291, %v288
    %295 = vst.msk [vmem:[%s3 + $0x18] sm:$0xff] %vm291, %v290
    // Predicated region
    $region18: #{type4_forward.1} parent=1 // pred_check
      _
    $region19: #{type4_forward.1} parent=1 // pred_check_branch
      %297 = sbr.rel (0) target = $region21
    $region20: #{type4_forward.1} parent=1 // pred_region
      _
    $region21: #{type4_forward.1} parent=1 // pred_fallthru
      _
    // Predicated region
    $region22: #{type4_forward.1} parent=1 // pred_check
      _
    $region23: #{type4_forward.1} parent=1 // pred_check_branch
      %299 = sbr.rel (0) target = $region25
    $region24: #{type4_forward.1} parent=1 // pred_region
      _
    $region25: #{type4_forward.1} parent=1 // pred_fallthru
      _
    %300 = vsyncpa [#allocation3], 1

</llo_original>
